<compile_context>
chip_gen: v7x
topology: tpu7x:2x2x1
jax: 0.10.0
libtpu: 0.0.40
codegen_flags: <defaults>
</compile_context>

<pallas_src>
import functools

import numpy as np
import jax
import jax.numpy as jnp
from jax.experimental import pallas as pl
from jax.experimental.pallas import tpu as pltpu

# ---------------------------------------------------------------- config ----
Z_DIM = 32
HID_DIM = 32
NUM_LAYERS = 3
NUM_EXTERNAL_PARAMS = 64
MAIN_BRANCH_WEIGHT = 0.1
RESIDUAL = True
BATCH = 2

F_PAD = 128          # lane-dense padded feature width (all feature dims <= 128)
TM_MAX = 128         # max batch-tile rows per grid step (full MXU granularity)

DIMS = [Z_DIM] + [HID_DIM] * NUM_LAYERS + [NUM_EXTERNAL_PARAMS]
NUM_BLOCKS = len(DIMS) - 2          # INRGeneratorBlocks
NUM_MATMULS = NUM_BLOCKS + 1        # blocks + connector
# residual gating uses the ORIGINAL (unpadded) feature dims, as in PyTorch
RESIDUAL_FLAGS = tuple(
    (DIMS[i] == DIMS[i + 1]) and RESIDUAL and (i != 0) for i in range(NUM_BLOCKS)
)
# nn.Parameter(main_branch_weight) — identical per block in this config; baked
# in via closure instead of an SMEM operand.
MAIN_BRANCH_WEIGHTS = tuple(float(MAIN_BRANCH_WEIGHT) for _ in range(NUM_BLOCKS))


# ---------------------------------------------------------------- kernel ----
def _generator_kernel(z_ref, w_ref, b_ref, out_ref, *, main_branch_weights):
    """One batch tile of mapping_network + connector.

    z_ref   : VMEM (tm, F_PAD)                 f32  zero-padded latents
    w_ref   : VMEM (NUM_MATMULS, F_PAD, F_PAD) bf16 stacked transposed weights
    b_ref   : VMEM (NUM_MATMULS, 1, F_PAD)     f32  stacked biases
    out_ref : VMEM (tm, F_PAD)                 f32  lane-dense output slab
    """
    x = z_ref[...]                                   # f32 master activations
    for i in range(NUM_BLOCKS):
        # MXU bf16 x bf16 -> f32 accumulate; bias/ReLU/residual in f32 on VPU.
        y = jnp.dot(x.astype(jnp.bfloat16), w_ref[i],
                    preferred_element_type=jnp.float32) + b_ref[i]
        y = jnp.maximum(y, 0.0)                      # create_activation('relu')
        if RESIDUAL_FLAGS[i]:
            x = x + main_branch_weights[i] * y       # x + mbw * transform(x)
        else:
            x = y

    out = jnp.dot(x.astype(jnp.bfloat16), w_ref[NUM_BLOCKS],
                  preferred_element_type=jnp.float32) + b_ref[NUM_BLOCKS]
    out_ref[...] = out                               # full 128-lane unmasked store


# --------------------------------------------------------------- wrapper ----
@jax.jit
def compute_model_forward(z, w_stack, b_stack):
    """Pallas equivalent of INRGenerator.compute_model_forward."""
    b = z.shape[0]
    # Tile height: multiple of 8 sublanes, capped at 128 rows. Small batches
    # (like the demo's B=2) then only move an 8-row tile instead of 128.
    tm = min(TM_MAX, ((b + 7) // 8) * 8)
    b_pad = pl.cdiv(b, tm) * tm

    # Zero-pad batch rows and feature lanes; padded lanes stay exactly 0 all
    # the way through (zero weights, zero biases, relu(0)=0, residual keeps 0).
    z_pad = jnp.pad(z.astype(jnp.float32),
                    ((0, b_pad - b), (0, F_PAD - z.shape[1])))

    kernel = functools.partial(_generator_kernel,
                               main_branch_weights=MAIN_BRANCH_WEIGHTS)

    out_pad = pl.pallas_call(
        kernel,
        out_shape=jax.ShapeDtypeStruct((b_pad, F_PAD), jnp.float32),
        grid_spec=pltpu.PrefetchScalarGridSpec(
            num_scalar_prefetch=0,
            grid=(b_pad // tm,),
            in_specs=[
                pl.BlockSpec((tm, F_PAD), lambda i: (i, 0)),
                # weights/biases: same block every grid step -> VMEM-resident
                pl.BlockSpec((NUM_MATMULS, F_PAD, F_PAD), lambda i: (0, 0, 0)),
                pl.BlockSpec((NUM_MATMULS, 1, F_PAD), lambda i: (0, 0, 0)),
            ],
            out_specs=pl.BlockSpec((tm, F_PAD), lambda i: (i, 0)),
        ),
        compiler_params=pltpu.CompilerParams(
            dimension_semantics=("parallel",),       # v7x: shard over 2 TCs
            vmem_limit_bytes=32 * 1024 * 1024,       # safe on v5e/v6e/v7x
        ),
    )(z_pad, w_stack, b_stack)

    return out_pad[:b, :NUM_EXTERNAL_PARAMS]


# ----------------------------------------------------------- param setup ----
def init_params(key):
    """Deterministic init mimicking nn.Linear defaults, padded + stacked.

    Returns:
      w_stack: (NUM_MATMULS, F_PAD, F_PAD) bf16, transposed (in, out) blocks,
               zero padded.
      b_stack: (NUM_MATMULS, 1, F_PAD) f32, zero padded.
    """
    w_stack = jnp.zeros((NUM_MATMULS, F_PAD, F_PAD), jnp.float32)
    b_stack = jnp.zeros((NUM_MATMULS, 1, F_PAD), jnp.float32)

    for i in range(NUM_MATMULS):
        fan_in, fan_out = DIMS[i], DIMS[i + 1]
        key, kw, kb = jax.random.split(key, 3)
        bound = 1.0 / np.sqrt(fan_in)
        w = jax.random.uniform(kw, (fan_in, fan_out), jnp.float32, -bound, bound)
        b = jax.random.uniform(kb, (fan_out,), jnp.float32, -bound, bound)
        if i == NUM_MATMULS - 1:
            # connector_bias_zero_init: connector.bias.data.mul_(sqrt(1/dims[1]))
            b = b * np.sqrt(1.0 / DIMS[1])
        w_stack = w_stack.at[i, :fan_in, :fan_out].set(w)
        b_stack = b_stack.at[i, 0, :fan_out].set(b)

    return w_stack.astype(jnp.bfloat16), b_stack


def reference_forward(z, w_stack, b_stack):
    """Pure-JAX reference with identical bf16-weight / f32-accumulate numerics."""
    x = jnp.zeros((z.shape[0], F_PAD), jnp.float32)
    x = x.at[:, : z.shape[1]].set(z.astype(jnp.float32))
    for i in range(NUM_BLOCKS):
        y = jnp.dot(x.astype(jnp.bfloat16), w_stack[i],
                    preferred_element_type=jnp.float32) + b_stack[i]
        y = jnp.maximum(y, 0.0)
        x = x + MAIN_BRANCH_WEIGHTS[i] * y if RESIDUAL_FLAGS[i] else y
    out = jnp.dot(x.astype(jnp.bfloat16), w_stack[NUM_BLOCKS],
                  preferred_element_type=jnp.float32) + b_stack[NUM_BLOCKS]
    return out[:, :NUM_EXTERNAL_PARAMS]


# ------------------------------------------------------------------ main ----
if __name__ == "__main__":
    key = jax.random.PRNGKey(0)
    key, kz = jax.random.split(key)
    z = jax.random.normal(kz, (BATCH, Z_DIM), dtype=jnp.float32)

    w_stack, b_stack = init_params(key)

    out = compute_model_forward(z, w_stack, b_stack)
    out = jax.block_until_ready(out)

    ref = reference_forward(z, w_stack, b_stack)
    np.testing.assert_allclose(np.asarray(out), np.asarray(ref),
                               rtol=1e-3, atol=1e-3)
    assert out.shape == (BATCH, NUM_EXTERNAL_PARAMS)
    print("KERNEL_OK")
</pallas_src>

<mosaic_0001>
module attributes {stable_mosaic.version = 11 : i64} {
  func.func @_generator_kernel(%arg0: i32, %arg1: memref<8x128xf32, #tpu.memory_space<vmem>>, %arg2: memref<4x128x128xbf16, #tpu.memory_space<vmem>>, %arg3: memref<4x1x128xf32, #tpu.memory_space<vmem>>, %arg4: memref<8x128xf32, #tpu.memory_space<vmem>>) attributes {dimension_semantics = [#tpu.dimension_semantics<parallel>], iteration_bounds = array<i64: 1>, scalar_prefetch = 0 : i64, scratch_operands = 0 : i64, tpu.core_type = #tpu.core_type<tc>, window_params = [{transform_indices = @transform_0, window_bounds = array<i64: 8, 128>}, {pipeline_mode = #tpu.pipeline_mode<synchronous>, transform_indices = @transform_1, window_bounds = array<i64: 4, 128, 128>}, {pipeline_mode = #tpu.pipeline_mode<synchronous>, transform_indices = @transform_2, window_bounds = array<i64: 4, 1, 128>}, {transform_indices = @transform_3, window_bounds = array<i64: 8, 128>}]} {
    %c0 = arith.constant 0 : index
    %c0_0 = arith.constant 0 : index
    %0 = vector.load %arg1[%c0, %c0_0] : memref<8x128xf32, #tpu.memory_space<vmem>>, vector<8x128xf32>
    %1 = arith.truncf %0 : vector<8x128xf32> to vector<8x128xbf16>
    %c0_1 = arith.constant 0 : index
    %c0_2 = arith.constant 0 : index
    %c0_3 = arith.constant 0 : index
    %2 = vector.load %arg2[%c0_1, %c0_2, %c0_3] : memref<4x128x128xbf16, #tpu.memory_space<vmem>>, vector<1x128x128xbf16>
    %3 = vector.shape_cast %2 : vector<1x128x128xbf16> to vector<128x128xbf16>
    %cst = arith.constant dense<0.000000e+00> : vector<8x128xf32>
    %4 = tpu.matmul %1, %3, %cst {dimension_numbers = #tpu.dot_dimension_numbers<[1], [0], [0], [1], [0, 0, 1, 1], [], []>} : vector<8x128xbf16>, vector<128x128xbf16>, vector<8x128xf32> -> vector<8x128xf32>
    %c0_4 = arith.constant 0 : index
    %c0_5 = arith.constant 0 : index
    %c0_6 = arith.constant 0 : index
    %5 = vector.load %arg3[%c0_4, %c0_5, %c0_6] : memref<4x1x128xf32, #tpu.memory_space<vmem>>, vector<1x1x128xf32>
    %6 = vector.shape_cast %5 : vector<1x1x128xf32> to vector<1x128xf32>
    %7 = vector.broadcast %6 : vector<1x128xf32> to vector<8x128xf32>
    %8 = arith.addf %4, %7 : vector<8x128xf32>
    %cst_7 = arith.constant 0.000000e+00 : f32
    %9 = vector.broadcast %cst_7 : f32 to vector<8x128xf32>
    %10 = arith.maximumf %8, %9 : vector<8x128xf32>
    %11 = arith.truncf %10 : vector<8x128xf32> to vector<8x128xbf16>
    %c1 = arith.constant 1 : index
    %c0_8 = arith.constant 0 : index
    %c0_9 = arith.constant 0 : index
    %12 = vector.load %arg2[%c1, %c0_8, %c0_9] : memref<4x128x128xbf16, #tpu.memory_space<vmem>>, vector<1x128x128xbf16>
    %13 = vector.shape_cast %12 : vector<1x128x128xbf16> to vector<128x128xbf16>
    %cst_10 = arith.constant dense<0.000000e+00> : vector<8x128xf32>
    %14 = tpu.matmul %11, %13, %cst_10 {dimension_numbers = #tpu.dot_dimension_numbers<[1], [0], [0], [1], [0, 0, 1, 1], [], []>} : vector<8x128xbf16>, vector<128x128xbf16>, vector<8x128xf32> -> vector<8x128xf32>
    %c1_11 = arith.constant 1 : index
    %c0_12 = arith.constant 0 : index
    %c0_13 = arith.constant 0 : index
    %15 = vector.load %arg3[%c1_11, %c0_12, %c0_13] : memref<4x1x128xf32, #tpu.memory_space<vmem>>, vector<1x1x128xf32>
    %16 = vector.shape_cast %15 : vector<1x1x128xf32> to vector<1x128xf32>
    %17 = vector.broadcast %16 : vector<1x128xf32> to vector<8x128xf32>
    %18 = arith.addf %14, %17 : vector<8x128xf32>
    %cst_14 = arith.constant 0.000000e+00 : f32
    %19 = vector.broadcast %cst_14 : f32 to vector<8x128xf32>
    %20 = arith.maximumf %18, %19 : vector<8x128xf32>
    %cst_15 = arith.constant 1.000000e-01 : f32
    %21 = vector.broadcast %cst_15 : f32 to vector<8x128xf32>
    %22 = arith.mulf %21, %20 : vector<8x128xf32>
    %23 = arith.addf %10, %22 : vector<8x128xf32>
    %24 = arith.truncf %23 : vector<8x128xf32> to vector<8x128xbf16>
    %c2 = arith.constant 2 : index
    %c0_16 = arith.constant 0 : index
    %c0_17 = arith.constant 0 : index
    %25 = vector.load %arg2[%c2, %c0_16, %c0_17] : memref<4x128x128xbf16, #tpu.memory_space<vmem>>, vector<1x128x128xbf16>
    %26 = vector.shape_cast %25 : vector<1x128x128xbf16> to vector<128x128xbf16>
    %cst_18 = arith.constant dense<0.000000e+00> : vector<8x128xf32>
    %27 = tpu.matmul %24, %26, %cst_18 {dimension_numbers = #tpu.dot_dimension_numbers<[1], [0], [0], [1], [0, 0, 1, 1], [], []>} : vector<8x128xbf16>, vector<128x128xbf16>, vector<8x128xf32> -> vector<8x128xf32>
    %c2_19 = arith.constant 2 : index
    %c0_20 = arith.constant 0 : index
    %c0_21 = arith.constant 0 : index
    %28 = vector.load %arg3[%c2_19, %c0_20, %c0_21] : memref<4x1x128xf32, #tpu.memory_space<vmem>>, vector<1x1x128xf32>
    %29 = vector.shape_cast %28 : vector<1x1x128xf32> to vector<1x128xf32>
    %30 = vector.broadcast %29 : vector<1x128xf32> to vector<8x128xf32>
    %31 = arith.addf %27, %30 : vector<8x128xf32>
    %cst_22 = arith.constant 0.000000e+00 : f32
    %32 = vector.broadcast %cst_22 : f32 to vector<8x128xf32>
    %33 = arith.maximumf %31, %32 : vector<8x128xf32>
    %cst_23 = arith.constant 1.000000e-01 : f32
    %34 = vector.broadcast %cst_23 : f32 to vector<8x128xf32>
    %35 = arith.mulf %34, %33 : vector<8x128xf32>
    %36 = arith.addf %23, %35 : vector<8x128xf32>
    %37 = arith.truncf %36 : vector<8x128xf32> to vector<8x128xbf16>
    %c3 = arith.constant 3 : index
    %c0_24 = arith.constant 0 : index
    %c0_25 = arith.constant 0 : index
    %38 = vector.load %arg2[%c3, %c0_24, %c0_25] : memref<4x128x128xbf16, #tpu.memory_space<vmem>>, vector<1x128x128xbf16>
    %39 = vector.shape_cast %38 : vector<1x128x128xbf16> to vector<128x128xbf16>
    %cst_26 = arith.constant dense<0.000000e+00> : vector<8x128xf32>
    %40 = tpu.matmul %37, %39, %cst_26 {dimension_numbers = #tpu.dot_dimension_numbers<[1], [0], [0], [1], [0, 0, 1, 1], [], []>} : vector<8x128xbf16>, vector<128x128xbf16>, vector<8x128xf32> -> vector<8x128xf32>
    %c3_27 = arith.constant 3 : index
    %c0_28 = arith.constant 0 : index
    %c0_29 = arith.constant 0 : index
    %41 = vector.load %arg3[%c3_27, %c0_28, %c0_29] : memref<4x1x128xf32, #tpu.memory_space<vmem>>, vector<1x1x128xf32>
    %42 = vector.shape_cast %41 : vector<1x1x128xf32> to vector<1x128xf32>
    %43 = vector.broadcast %42 : vector<1x128xf32> to vector<8x128xf32>
    %44 = arith.addf %40, %43 : vector<8x128xf32>
    %c0_30 = arith.constant 0 : index
    %c0_31 = arith.constant 0 : index
    %45 = vector.load %arg4[%c0_30, %c0_31] : memref<8x128xf32, #tpu.memory_space<vmem>>, vector<8x128xf32>
    tpu.vector_store %arg4[%c0_30, %c0_31], %44 {strides = array<i32>} : memref<8x128xf32, #tpu.memory_space<vmem>>, vector<8x128xf32>,
    return
  }
  func.func @transform_0(%arg0: i32) -> (i32, i32) {
    %c0_i32 = arith.constant 0 : i32
    %c0_i32_0 = arith.constant 0 : i32
    return %arg0, %c0_i32 : i32, i32
  }
  func.func @transform_1(%arg0: i32) -> (i32, i32, i32) {
    %c0_i32 = arith.constant 0 : i32
    %c0_i32_0 = arith.constant 0 : i32
    %c0_i32_1 = arith.constant 0 : i32
    %c0_i32_2 = arith.constant 0 : i32
    return %c0_i32, %c0_i32_0, %c0_i32_1 : i32, i32, i32
  }
  func.func @transform_2(%arg0: i32) -> (i32, i32, i32) {
    %c0_i32 = arith.constant 0 : i32
    %c0_i32_0 = arith.constant 0 : i32
    %c0_i32_1 = arith.constant 0 : i32
    %c0_i32_2 = arith.constant 0 : i32
    return %c0_i32, %c0_i32_0, %c0_i32_1 : i32, i32, i32
  }
  func.func @transform_3(%arg0: i32) -> (i32, i32) {
    %c0_i32 = arith.constant 0 : i32
    %c0_i32_0 = arith.constant 0 : i32
    return %arg0, %c0_i32 : i32, i32
  }
}

</mosaic_0001>

<llo_original>
// kernel: compute_model_forward.1
$region0: #{compute_model_forward.1}
  #allocation0 [shape = 'u32[]', space=smem, size = 0x4, offset = 0x4, fixed_abs, tag = 'smem constant byte address 0x4 - core index']
  #allocation1 [shape = 'u32[144,128]{1,0:T(1,128)}', space=vmem, size = 0x12000, scoped, tag = 'internal scratch']
  %s0 = inlined_call_operand.vmem [shape: f32[8,128], index: 0, kind: input, shape index: {}]
  %s1 = inlined_call_operand.hbm [shape: bf16[4,128,128], index: 1, kind: input, shape index: {}]
  %s2 = inlined_call_operand.vmem [shape: f32[4,1,128], index: 2, kind: input, shape index: {}]
  %s3 = inlined_call_operand.vmem [shape: f32[8,128], index: 3, kind: output, shape index: {}]
  %s4 = sld [smem:[#allocation0]]
  $region26: #{compute_model_forward.1} parent=0
    _
  %s6 = ssub.s32 1, %s4
  %s7 = scalar_select 0, %s6, %s4
  $region1: #{compute_model_forward.1} parent=0
    #allocation2 [shape = 'u8[131072]{0}', space=vmem, size = 0x20000, scoped, tag = 'input window, operand 1, single buffered']
    #allocation3 [shape = 's32[1]{0}', space=sflag, size = 0x4, scoped, tag = 'scoped memory for compute_model_forward.1']
    %8 = vsyncpa [#allocation3], 0
    // Predicated region
    $region2: #{compute_model_forward.1} parent=1 // pred_check
      _
    $region3: #{compute_model_forward.1} parent=1 // pred_check_branch
      %10 = sbr.rel (0) target = $region5
    $region4: #{compute_model_forward.1} parent=1 // pred_region
      _
    $region5: #{compute_model_forward.1} parent=1 // pred_fallthru
      _
    // Predicated region
    $region6: #{compute_model_forward.1} parent=1 // pred_check
      _
    $region7: #{compute_model_forward.1} parent=1 // pred_check_branch
      %12 = sbr.rel (0) target = $region9
    $region8: #{compute_model_forward.1} parent=1 // pred_region
      %s14 = ssub.s32 4096, 4096
      %15 = vsyncadd [#allocation3], %s14
      %s16 = sshll.u32 [#allocation2], 4
      %s17 = int_to_ptr.vmem [resolvable:$true] %s16
      %22 = dma.hbm_to_vmem [thread:$0]  %s1, 4096, %s17, [#allocation3], 64, 64, 4
    $region9: #{compute_model_forward.1} parent=1 // pred_fallthru
      _
    // Predicated region
    $region10: #{compute_model_forward.1} parent=1 // pred_check
      _
    $region11: #{compute_model_forward.1} parent=1 // pred_check_branch
      %24 = sbr.rel (0) target = $region13
    $region12: #{compute_model_forward.1} parent=1 // pred_region
      _
    $region13: #{compute_model_forward.1} parent=1 // pred_fallthru
      _
    // Predicated region
    $region14: #{compute_model_forward.1} parent=1 // pred_check
      _
    $region15: #{compute_model_forward.1} parent=1 // pred_check_branch
      %26 = sbr.rel (0) target = $region17
    $region16: #{compute_model_forward.1} parent=1 // pred_region
      %27 = dma.done [#allocation3], 4096
    $region17: #{compute_model_forward.1} parent=1 // pred_fallthru
      _
    %v29 = vld [vmem:[%s0] sm:$0xff]
    %v30 = vpack.c.bf16 %v29, %v29
    %v31 = vld [vmem:[#allocation2] sm:$0xf]
    %v32 = vld [vmem:[#allocation2 + $0x4] sm:$0xf]
    %v33 = vld [vmem:[#allocation2 + $0x8] sm:$0xf]
    %v34 = vld [vmem:[#allocation2 + $0xc] sm:$0xf]
    %v35 = vld [vmem:[#allocation2 + $0x10] sm:$0xf]
    %v36 = vld [vmem:[#allocation2 + $0x14] sm:$0xf]
    %v37 = vld [vmem:[#allocation2 + $0x18] sm:$0xf]
    %v38 = vld [vmem:[#allocation2 + $0x1c] sm:$0xf]
    %v39 = vld [vmem:[#allocation2 + $0x20] sm:$0xf]
    %v40 = vld [vmem:[#allocation2 + $0x24] sm:$0xf]
    %v41 = vld [vmem:[#allocation2 + $0x28] sm:$0xf]
    %v42 = vld [vmem:[#allocation2 + $0x2c] sm:$0xf]
    %v43 = vld [vmem:[#allocation2 + $0x30] sm:$0xf]
    %v44 = vld [vmem:[#allocation2 + $0x34] sm:$0xf]
    %v45 = vld [vmem:[#allocation2 + $0x38] sm:$0xf]
    %v46 = vld [vmem:[#allocation2 + $0x3c] sm:$0xf]
    %v47 = vld [vmem:[%s2] sm:$0x1]
    %v49 = vlaneseq
    %v50 = vshrl.u32 %v49, 7
    %v51 = vsub.s32 0, %v50
    %v52 = vrot.slane %v47, %v51
    %v70 = vunpack.c.l.b16 %v31
    %v71 = vunpack.c.l.b16 %v32
    %v72 = vunpack.c.l.b16 %v33
    %v73 = vunpack.c.l.b16 %v34
    %v74 = vunpack.c.l.b16 %v35
    %v75 = vunpack.c.l.b16 %v36
    %v76 = vunpack.c.l.b16 %v37
    %v77 = vunpack.c.l.b16 %v38
    %v78 = vunpack.c.l.b16 %v39
    %v79 = vunpack.c.l.b16 %v40
    %v80 = vunpack.c.l.b16 %v41
    %v81 = vunpack.c.l.b16 %v42
    %v82 = vunpack.c.l.b16 %v43
    %v83 = vunpack.c.l.b16 %v44
    %v84 = vunpack.c.l.b16 %v45
    %v85 = vunpack.c.l.b16 %v46
    %v86 = vpack.c.b16 %v71, %v70
    %v87 = vpack.c.b16 %v73, %v72
    %v88 = vpack.c.b16 %v75, %v74
    %v89 = vpack.c.b16 %v77, %v76
    %v90 = vpack.c.b16 %v79, %v78
    %v91 = vpack.c.b16 %v81, %v80
    %v92 = vpack.c.b16 %v83, %v82
    %v93 = vpack.c.b16 %v85, %v84
    %102 = vmatprep.subr.bf16.mxu0 0
    %103 = vmatpush1.bf16.msra.mxu0 %v86
    %104 = vmatprep.subr.bf16.mxu0 0
    %105 = vmatpush1.bf16.msra.mxu0 %v87
    %106 = vmatprep.subr.bf16.mxu0 0
    %107 = vmatpush1.bf16.msra.mxu0 %v88
    %108 = vmatprep.subr.bf16.mxu0 0
    %109 = vmatpush1.bf16.msra.mxu0 %v89
    %110 = vmatprep.subr.bf16.mxu0 0
    %111 = vmatpush1.bf16.msra.mxu0 %v90
    %112 = vmatprep.subr.bf16.mxu0 0
    %113 = vmatpush1.bf16.msra.mxu0 %v91
    %114 = vmatprep.subr.bf16.mxu0 0
    %115 = vmatpush1.bf16.msra.mxu0 %v92
    %116 = vmatprep.subr.bf16.mxu0 0
    %117 = vmatpush1.bf16.msra.mxu0 %v93
    %118 = vmatprep.subr.bf16.mxu0 0
    %119 = vmatpush1.bf16.msra.mxu0 0
    %120 = vmatprep.subr.bf16.mxu0 0
    %121 = vmatpush1.bf16.msra.mxu0 0
    %122 = vmatprep.subr.bf16.mxu0 0
    %123 = vmatpush1.bf16.msra.mxu0 0
    %124 = vmatprep.subr.bf16.mxu0 0
    %125 = vmatpush1.bf16.msra.mxu0 0
    %126 = vmatprep.subr.bf16.mxu0 0
    %127 = vmatpush1.bf16.msra.mxu0 0
    %128 = vmatprep.subr.bf16.mxu0 0
    %129 = vmatpush1.bf16.msra.mxu0 0
    %130 = vmatprep.subr.bf16.mxu0 0
    %131 = vmatpush1.bf16.msra.mxu0 0
    %132 = vmatprep.subr.bf16.mxu0 0
    %133 = vmatpush1.bf16.msra.mxu0 0
    %134 = vmatprep.mubr.bf16.mxu0 0
    %135 = vmatmul.mubr.bf16.gmra.mrb[0].mxu0 %v30
    %v136 = vpop.f32.mrb[0].mxu0
    %v137 = vadd.f32 %v52, %v136
    %v138 = vpop.f32.mrb[0].mxu0
    %v139 = vpop.f32.mrb[0].mxu0
    %v140 = vpop.f32.mrb[0].mxu0
    %141 = vdwg.mxu0
    %v142 = vmax.f32 %v137, 0.0
    %v143 = vpack.c.bf16 %v142, %v142
    %s144 = scalar_lea.vmem [#allocation2], 64
    %v145 = vld [vmem:[%s144] sm:$0xf]
    %v146 = vld [vmem:[%s144 + $0x4] sm:$0xf]
    %v147 = vld [vmem:[%s144 + $0x8] sm:$0xf]
    %v148 = vld [vmem:[%s144 + $0xc] sm:$0xf]
    %v149 = vld [vmem:[%s144 + $0x10] sm:$0xf]
    %v150 = vld [vmem:[%s144 + $0x14] sm:$0xf]
    %v151 = vld [vmem:[%s144 + $0x18] sm:$0xf]
    %v152 = vld [vmem:[%s144 + $0x1c] sm:$0xf]
    %v153 = vld [vmem:[%s144 + $0x20] sm:$0xf]
    %v154 = vld [vmem:[%s144 + $0x24] sm:$0xf]
    %v155 = vld [vmem:[%s144 + $0x28] sm:$0xf]
    %v156 = vld [vmem:[%s144 + $0x2c] sm:$0xf]
    %v157 = vld [vmem:[%s144 + $0x30] sm:$0xf]
    %v158 = vld [vmem:[%s144 + $0x34] sm:$0xf]
    %v159 = vld [vmem:[%s144 + $0x38] sm:$0xf]
    %v160 = vld [vmem:[%s144 + $0x3c] sm:$0xf]
    %s161 = scalar_lea.vmem %s2, 1
    %v162 = vld [vmem:[%s161] sm:$0x1]
    %v164 = vlaneseq
    %v165 = vshrl.u32 %v164, 7
    %v166 = vsub.s32 0, %v165
    %v167 = vrot.slane %v162, %v166
    %v185 = vunpack.c.l.b16 %v145
    %v186 = vunpack.c.l.b16 %v146
    %v187 = vunpack.c.l.b16 %v147
    %v188 = vunpack.c.l.b16 %v148
    %v189 = vunpack.c.l.b16 %v149
    %v190 = vunpack.c.l.b16 %v150
    %v191 = vunpack.c.l.b16 %v151
    %v192 = vunpack.c.l.b16 %v152
    %v193 = vunpack.c.l.b16 %v153
    %v194 = vunpack.c.l.b16 %v154
    %v195 = vunpack.c.l.b16 %v155
    %v196 = vunpack.c.l.b16 %v156
    %v197 = vunpack.c.l.b16 %v157
    %v198 = vunpack.c.l.b16 %v158
    %v199 = vunpack.c.l.b16 %v159
    %v200 = vunpack.c.l.b16 %v160
    %v201 = vpack.c.b16 %v186, %v185
    %v202 = vpack.c.b16 %v188, %v187
    %v203 = vpack.c.b16 %v190, %v189
    %v204 = vpack.c.b16 %v192, %v191
    %v205 = vpack.c.b16 %v194, %v193
    %v206 = vpack.c.b16 %v196, %v195
    %v207 = vpack.c.b16 %v198, %v197
    %v208 = vpack.c.b16 %v200, %v199
    %217 = vmatprep.subr.bf16.mxu0 0
    %218 = vmatpush1.bf16.msra.mxu0 %v201
    %219 = vmatprep.subr.bf16.mxu0 0
    %220 = vmatpush1.bf16.msra.mxu0 %v202
    %221 = vmatprep.subr.bf16.mxu0 0
    %222 = vmatpush1.bf16.msra.mxu0 %v203
    %223 = vmatprep.subr.bf16.mxu0 0
    %224 = vmatpush1.bf16.msra.mxu0 %v204
    %225 = vmatprep.subr.bf16.mxu0 0
    %226 = vmatpush1.bf16.msra.mxu0 %v205
    %227 = vmatprep.subr.bf16.mxu0 0
    %228 = vmatpush1.bf16.msra.mxu0 %v206
    %229 = vmatprep.subr.bf16.mxu0 0
    %230 = vmatpush1.bf16.msra.mxu0 %v207
    %231 = vmatprep.subr.bf16.mxu0 0
    %232 = vmatpush1.bf16.msra.mxu0 %v208
    %233 = vmatprep.subr.bf16.mxu0 0
    %234 = vmatpush1.bf16.msra.mxu0 0
    %235 = vmatprep.subr.bf16.mxu0 0
    %236 = vmatpush1.bf16.msra.mxu0 0
    %237 = vmatprep.subr.bf16.mxu0 0
    %238 = vmatpush1.bf16.msra.mxu0 0
    %239 = vmatprep.subr.bf16.mxu0 0
    %240 = vmatpush1.bf16.msra.mxu0 0
    %241 = vmatprep.subr.bf16.mxu0 0
    %242 = vmatpush1.bf16.msra.mxu0 0
    %243 = vmatprep.subr.bf16.mxu0 0
    %244 = vmatpush1.bf16.msra.mxu0 0
    %245 = vmatprep.subr.bf16.mxu0 0
    %246 = vmatpush1.bf16.msra.mxu0 0
    %247 = vmatprep.subr.bf16.mxu0 0
    %248 = vmatpush1.bf16.msra.mxu0 0
    %249 = vmatprep.mubr.bf16.mxu0 0
    %250 = vmatmul.mubr.bf16.gmra.mrb[0].mxu0 %v143
    %v251 = vpop.f32.mrb[0].mxu0
    %v252 = vadd.f32 %v167, %v251
    %v253 = vpop.f32.mrb[0].mxu0
    %v254 = vpop.f32.mrb[0].mxu0
    %v255 = vpop.f32.mrb[0].mxu0
    %256 = vdwg.mxu0
    %v257 = vmax.f32 %v252, 0.0
    %v258 = vmul.f32 %v257, 0.1
    %v259 = vadd.f32 %v142, %v258
    %v260 = vpack.c.bf16 %v259, %v259
    %s261 = scalar_lea.vmem [#allocation2], 128
    %v262 = vld [vmem:[%s261] sm:$0xf]
    %v263 = vld [vmem:[%s261 + $0x4] sm:$0xf]
    %v264 = vld [vmem:[%s261 + $0x8] sm:$0xf]
    %v265 = vld [vmem:[%s261 + $0xc] sm:$0xf]
    %v266 = vld [vmem:[%s261 + $0x10] sm:$0xf]
    %v267 = vld [vmem:[%s261 + $0x14] sm:$0xf]
    %v268 = vld [vmem:[%s261 + $0x18] sm:$0xf]
    %v269 = vld [vmem:[%s261 + $0x1c] sm:$0xf]
    %v270 = vld [vmem:[%s261 + $0x20] sm:$0xf]
    %v271 = vld [vmem:[%s261 + $0x24] sm:$0xf]
    %v272 = vld [vmem:[%s261 + $0x28] sm:$0xf]
    %v273 = vld [vmem:[%s261 + $0x2c] sm:$0xf]
    %v274 = vld [vmem:[%s261 + $0x30] sm:$0xf]
    %v275 = vld [vmem:[%s261 + $0x34] sm:$0xf]
    %v276 = vld [vmem:[%s261 + $0x38] sm:$0xf]
    %v277 = vld [vmem:[%s261 + $0x3c] sm:$0xf]
    %s278 = scalar_lea.vmem %s2, 2
    %v279 = vld [vmem:[%s278] sm:$0x1]
    %v281 = vlaneseq
    %v282 = vshrl.u32 %v281, 7
    %v283 = vsub.s32 0, %v282
    %v284 = vrot.slane %v279, %v283
    %v302 = vunpack.c.l.b16 %v262
    %v303 = vunpack.c.l.b16 %v263
    %v304 = vunpack.c.l.b16 %v264
    %v305 = vunpack.c.l.b16 %v265
    %v306 = vunpack.c.l.b16 %v266
    %v307 = vunpack.c.l.b16 %v267
    %v308 = vunpack.c.l.b16 %v268
    %v309 = vunpack.c.l.b16 %v269
    %v310 = vunpack.c.l.b16 %v270
    %v311 = vunpack.c.l.b16 %v271
    %v312 = vunpack.c.l.b16 %v272
    %v313 = vunpack.c.l.b16 %v273
    %v314 = vunpack.c.l.b16 %v274
    %v315 = vunpack.c.l.b16 %v275
    %v316 = vunpack.c.l.b16 %v276
    %v317 = vunpack.c.l.b16 %v277
    %v318 = vpack.c.b16 %v303, %v302
    %v319 = vpack.c.b16 %v305, %v304
    %v320 = vpack.c.b16 %v307, %v306
    %v321 = vpack.c.b16 %v309, %v308
    %v322 = vpack.c.b16 %v311, %v310
    %v323 = vpack.c.b16 %v313, %v312
    %v324 = vpack.c.b16 %v315, %v314
    %v325 = vpack.c.b16 %v317, %v316
    %334 = vmatprep.subr.bf16.mxu0 0
    %335 = vmatpush1.bf16.msra.mxu0 %v318
    %336 = vmatprep.subr.bf16.mxu0 0
    %337 = vmatpush1.bf16.msra.mxu0 %v319
    %338 = vmatprep.subr.bf16.mxu0 0
    %339 = vmatpush1.bf16.msra.mxu0 %v320
    %340 = vmatprep.subr.bf16.mxu0 0
    %341 = vmatpush1.bf16.msra.mxu0 %v321
    %342 = vmatprep.subr.bf16.mxu0 0
    %343 = vmatpush1.bf16.msra.mxu0 %v322
    %344 = vmatprep.subr.bf16.mxu0 0
    %345 = vmatpush1.bf16.msra.mxu0 %v323
    %346 = vmatprep.subr.bf16.mxu0 0
    %347 = vmatpush1.bf16.msra.mxu0 %v324
    %348 = vmatprep.subr.bf16.mxu0 0
    %349 = vmatpush1.bf16.msra.mxu0 %v325
    %350 = vmatprep.subr.bf16.mxu0 0
    %351 = vmatpush1.bf16.msra.mxu0 0
    %352 = vmatprep.subr.bf16.mxu0 0
    %353 = vmatpush1.bf16.msra.mxu0 0
    %354 = vmatprep.subr.bf16.mxu0 0
    %355 = vmatpush1.bf16.msra.mxu0 0
    %356 = vmatprep.subr.bf16.mxu0 0
    %357 = vmatpush1.bf16.msra.mxu0 0
    %358 = vmatprep.subr.bf16.mxu0 0
    %359 = vmatpush1.bf16.msra.mxu0 0
    %360 = vmatprep.subr.bf16.mxu0 0
    %361 = vmatpush1.bf16.msra.mxu0 0
    %362 = vmatprep.subr.bf16.mxu0 0
    %363 = vmatpush1.bf16.msra.mxu0 0
    %364 = vmatprep.subr.bf16.mxu0 0
    %365 = vmatpush1.bf16.msra.mxu0 0
    %366 = vmatprep.mubr.bf16.mxu0 0
    %367 = vmatmul.mubr.bf16.gmra.mrb[0].mxu0 %v260
    %v368 = vpop.f32.mrb[0].mxu0
    %v369 = vadd.f32 %v284, %v368
    %v370 = vpop.f32.mrb[0].mxu0
    %v371 = vpop.f32.mrb[0].mxu0
    %v372 = vpop.f32.mrb[0].mxu0
    %373 = vdwg.mxu0
    %v374 = vmax.f32 %v369, 0.0
    %v375 = vmul.f32 %v374, 0.1
    %v376 = vadd.f32 %v259, %v375
    %v377 = vpack.c.bf16 %v376, %v376
    %s378 = scalar_lea.vmem [#allocation2], 192
    %v379 = vld [vmem:[%s378] sm:$0xf]
    %v380 = vld [vmem:[%s378 + $0x4] sm:$0xf]
    %v381 = vld [vmem:[%s378 + $0x8] sm:$0xf]
    %v382 = vld [vmem:[%s378 + $0xc] sm:$0xf]
    %v383 = vld [vmem:[%s378 + $0x10] sm:$0xf]
    %v384 = vld [vmem:[%s378 + $0x14] sm:$0xf]
    %v385 = vld [vmem:[%s378 + $0x18] sm:$0xf]
    %v386 = vld [vmem:[%s378 + $0x1c] sm:$0xf]
    %v387 = vld [vmem:[%s378 + $0x20] sm:$0xf]
    %v388 = vld [vmem:[%s378 + $0x24] sm:$0xf]
    %v389 = vld [vmem:[%s378 + $0x28] sm:$0xf]
    %v390 = vld [vmem:[%s378 + $0x2c] sm:$0xf]
    %v391 = vld [vmem:[%s378 + $0x30] sm:$0xf]
    %v392 = vld [vmem:[%s378 + $0x34] sm:$0xf]
    %v393 = vld [vmem:[%s378 + $0x38] sm:$0xf]
    %v394 = vld [vmem:[%s378 + $0x3c] sm:$0xf]
    %s395 = scalar_lea.vmem %s2, 3
    %v396 = vld [vmem:[%s395] sm:$0x1]
    %v398 = vlaneseq
    %v399 = vshrl.u32 %v398, 7
    %v400 = vsub.s32 0, %v399
    %v401 = vrot.slane %v396, %v400
    %v419 = vunpack.c.l.b16 %v379
    %v420 = vunpack.c.l.b16 %v380
    %v421 = vunpack.c.l.b16 %v381
    %v422 = vunpack.c.l.b16 %v382
    %v423 = vunpack.c.l.b16 %v383
    %v424 = vunpack.c.l.b16 %v384
    %v425 = vunpack.c.l.b16 %v385
    %v426 = vunpack.c.l.b16 %v386
    %v427 = vunpack.c.l.b16 %v387
    %v428 = vunpack.c.l.b16 %v388
    %v429 = vunpack.c.l.b16 %v389
    %v430 = vunpack.c.l.b16 %v390
    %v431 = vunpack.c.l.b16 %v391
    %v432 = vunpack.c.l.b16 %v392
    %v433 = vunpack.c.l.b16 %v393
    %v434 = vunpack.c.l.b16 %v394
    %v435 = vpack.c.b16 %v420, %v419
    %v436 = vpack.c.b16 %v422, %v421
    %v437 = vpack.c.b16 %v424, %v423
    %v438 = vpack.c.b16 %v426, %v425
    %v439 = vpack.c.b16 %v428, %v427
    %v440 = vpack.c.b16 %v430, %v429
    %v441 = vpack.c.b16 %v432, %v431
    %v442 = vpack.c.b16 %v434, %v433
    %451 = vmatprep.subr.bf16.mxu0 0
    %452 = vmatpush1.bf16.msra.mxu0 %v435
    %453 = vmatprep.subr.bf16.mxu0 0
    %454 = vmatpush1.bf16.msra.mxu0 %v436
    %455 = vmatprep.subr.bf16.mxu0 0
    %456 = vmatpush1.bf16.msra.mxu0 %v437
    %457 = vmatprep.subr.bf16.mxu0 0
    %458 = vmatpush1.bf16.msra.mxu0 %v438
    %459 = vmatprep.subr.bf16.mxu0 0
    %460 = vmatpush1.bf16.msra.mxu0 %v439
    %461 = vmatprep.subr.bf16.mxu0 0
    %462 = vmatpush1.bf16.msra.mxu0 %v440
    %463 = vmatprep.subr.bf16.mxu0 0
    %464 = vmatpush1.bf16.msra.mxu0 %v441
    %465 = vmatprep.subr.bf16.mxu0 0
    %466 = vmatpush1.bf16.msra.mxu0 %v442
    %467 = vmatprep.subr.bf16.mxu0 0
    %468 = vmatpush1.bf16.msra.mxu0 0
    %469 = vmatprep.subr.bf16.mxu0 0
    %470 = vmatpush1.bf16.msra.mxu0 0
    %471 = vmatprep.subr.bf16.mxu0 0
    %472 = vmatpush1.bf16.msra.mxu0 0
    %473 = vmatprep.subr.bf16.mxu0 0
    %474 = vmatpush1.bf16.msra.mxu0 0
    %475 = vmatprep.subr.bf16.mxu0 0
    %476 = vmatpush1.bf16.msra.mxu0 0
    %477 = vmatprep.subr.bf16.mxu0 0
    %478 = vmatpush1.bf16.msra.mxu0 0
    %479 = vmatprep.subr.bf16.mxu0 0
    %480 = vmatpush1.bf16.msra.mxu0 0
    %481 = vmatprep.subr.bf16.mxu0 0
    %482 = vmatpush1.bf16.msra.mxu0 0
    %483 = vmatprep.mubr.bf16.mxu0 0
    %484 = vmatmul.mubr.bf16.gmra.mrb[0].mxu0 %v377
    %v485 = vpop.f32.mrb[0].mxu0
    %v486 = vadd.f32 %v401, %v485
    %v487 = vpop.f32.mrb[0].mxu0
    %v488 = vpop.f32.mrb[0].mxu0
    %v489 = vpop.f32.mrb[0].mxu0
    %490 = vdwg.mxu0
    %491 = vst [vmem:[%s3] sm:$0xff] %v486
    // Predicated region
    $region18: #{compute_model_forward.1} parent=1 // pred_check
      _
    $region19: #{compute_model_forward.1} parent=1 // pred_check_branch
      %493 = sbr.rel (0) target = $region21
    $region20: #{compute_model_forward.1} parent=1 // pred_region
      _
    $region21: #{compute_model_forward.1} parent=1 // pred_fallthru
      _
    // Predicated region
    $region22: #{compute_model_forward.1} parent=1 // pred_check
      _
    $region23: #{compute_model_forward.1} parent=1 // pred_check_branch
      %495 = sbr.rel (0) target = $region25
    $region24: #{compute_model_forward.1} parent=1 // pred_region
      _
    $region25: #{compute_model_forward.1} parent=1 // pred_fallthru
      _
    %496 = vsyncpa [#allocation3], 1

</llo_original>
